<compile_context>
chip_gen: v7x
topology: tpu7x:2x2x1
jax: 0.10.0
libtpu: 0.0.40
codegen_flags: <defaults>
</compile_context>

<pallas_src>
import functools

import jax
import jax.numpy as jnp
from jax.experimental import pallas as pl
from jax.experimental.pallas import tpu as pltpu


def _round_up(a: int, b: int) -> int:
    return (a + b - 1) // b * b


def _ffn_kernel(x_ref, wgu_ref, wd_ref, o_ref, acc_ref, *, td):
    # x_ref:   (tm, H_pad)
    # wgu_ref: (H_pad, 2*td)   -- [:, :td] = gate weights, [:, td:] = up weights
    # wd_ref:  (td, H_pad)
    # o_ref:   (tm, H_pad)
    # acc_ref: (tm, H_pad) f32 scratch, accumulated over the D (j) grid axis.
    j = pl.program_id(1)

    @pl.when(j == 0)
    def _():
        acc_ref[...] = jnp.zeros_like(acc_ref)

    x = x_ref[...]
    # Fused gate+up GEMM: one pass of x through the MXU for this D-tile.
    gu = jnp.dot(x, wgu_ref[...], preferred_element_type=jnp.float32)
    gate = gu[:, :td]
    up = gu[:, td:]
    # SiLU(gate) * up, kept in f32 vregs (EUP sigmoid, VPU mul).
    h = (gate * jax.nn.sigmoid(gate)) * up
    acc_ref[...] += jnp.dot(h.astype(wd_ref.dtype), wd_ref[...],
                            preferred_element_type=jnp.float32)

    @pl.when(j == pl.num_programs(1) - 1)
    def _():
        o_ref[...] = acc_ref[...].astype(o_ref.dtype)


def feed_forward(x, w_gate, w_up, w_down, *, tm=256, td=512,
                 vmem_limit_bytes=None):
    """SwiGLU FFN.  x: [tokens, hidden]; weights in [in, out] layout."""
    M, H = x.shape
    D = w_gate.shape[1]
    assert w_up.shape == (H, D) and w_down.shape == (D, H)

    # --- Padded / tiled geometry -------------------------------------------
    H_pad = _round_up(max(H, 128), 128)          # lane-dense last dim
    D_pad = _round_up(max(D, 128), 128)
    td = _round_up(td, 128)
    td = min(td, D_pad)
    D_pad = _round_up(D_pad, td)                 # td must divide D_pad
    tm = _round_up(tm, 8)
    tm = min(tm, _round_up(M, 8))                # don't overshoot tiny inputs
    M_pad = _round_up(M, tm)
    n_m = M_pad // tm
    n_d = D_pad // td

    # --- Zero-pad operands (zeros are mathematically inert here) ------------
    x_p = jnp.pad(x, ((0, M_pad - M), (0, H_pad - H)))
    wg_p = jnp.pad(w_gate, ((0, H_pad - H), (0, D_pad - D)))
    wu_p = jnp.pad(w_up, ((0, H_pad - H), (0, D_pad - D)))
    wd_p = jnp.pad(w_down, ((0, D_pad - D), (0, H_pad - H)))

    # Pre-tile & fuse gate/up:  wgu[j] = concat(wg[:, j*td:(j+1)*td],
    #                                           wu[:, j*td:(j+1)*td], axis=1)
    wgu = jnp.concatenate(
        [wg_p.reshape(H_pad, n_d, td), wu_p.reshape(H_pad, n_d, td)], axis=-1)
    wgu = jnp.transpose(wgu, (1, 0, 2))          # (n_d, H_pad, 2*td)

    # --- Cost estimate (advisory, for XLA scheduling around the call) -------
    flops = 2 * M_pad * H_pad * (2 * D_pad) + 2 * M_pad * D_pad * H_pad
    bytes_accessed = 4 * (x_p.size + M_pad * H_pad + wgu.size + wd_p.size)
    cost = pl.CostEstimate(flops=flops, transcendentals=M_pad * D_pad,
                           bytes_accessed=bytes_accessed)

    out_p = pl.pallas_call(
        functools.partial(_ffn_kernel, td=td),
        out_shape=jax.ShapeDtypeStruct((M_pad, H_pad), x.dtype),
        grid_spec=pltpu.PrefetchScalarGridSpec(
            num_scalar_prefetch=0,
            grid=(n_m, n_d),
            in_specs=[
                # x token tile (re-used across the D axis)
                pl.BlockSpec((tm, H_pad), lambda i, j: (i, 0)),
                # fused gate+up weight slab for D-tile j (leading dim squeezed)
                pl.BlockSpec((None, H_pad, 2 * td), lambda i, j: (j, 0, 0)),
                # down-proj weight slab for D-tile j
                pl.BlockSpec((td, H_pad), lambda i, j: (j, 0)),
            ],
            out_specs=pl.BlockSpec((tm, H_pad), lambda i, j: (i, 0)),
            scratch_shapes=[pltpu.VMEM((tm, H_pad), jnp.float32)],
        ),
        compiler_params=pltpu.CompilerParams(
            dimension_semantics=("parallel", "arbitrary"),
            vmem_limit_bytes=vmem_limit_bytes,
        ),
        cost_estimate=cost,
    )(x_p, wgu, wd_p)

    return out_p[:M, :H]


def feed_forward_ref(x, w_gate, w_up, w_down):
    gate = x @ w_gate
    up = x @ w_up
    return (jax.nn.silu(gate) * up) @ w_down


if __name__ == "__main__":
    # Module config: hidden_size=32, dim_mult=4 -> dim_inner=128
    batch, seq, hidden, dim_mult = 2, 8, 32, 4
    dim_inner = int(hidden * dim_mult)

    key = jax.random.PRNGKey(0)
    kx, kg, ku, kd = jax.random.split(key, 4)

    # Deterministic parameter init (uniform like nn.Linear default scale).
    bound_h = 1.0 / (hidden ** 0.5)
    bound_i = 1.0 / (dim_inner ** 0.5)
    w_gate = jax.random.uniform(kg, (hidden, dim_inner), jnp.float32,
                                minval=-bound_h, maxval=bound_h)
    w_up = jax.random.uniform(ku, (hidden, dim_inner), jnp.float32,
                              minval=-bound_h, maxval=bound_h)
    w_down = jax.random.uniform(kd, (dim_inner, hidden), jnp.float32,
                                minval=-bound_i, maxval=bound_i)

    x = jax.random.normal(kx, (batch, seq, hidden), jnp.float32)
    x2d = x.reshape(batch * seq, hidden)

    out2d = feed_forward(x2d, w_gate, w_up, w_down)
    out = out2d.reshape(batch, seq, hidden)
    jax.block_until_ready(out)

    ref = feed_forward_ref(x2d, w_gate, w_up, w_down).reshape(batch, seq, hidden)
    assert jnp.allclose(out, ref, atol=1e-5, rtol=1e-5), "mismatch vs reference"

    print("KERNEL_OK")
</pallas_src>

<mosaic_0001>
module attributes {stable_mosaic.version = 11 : i64} {
  func.func @_ffn_kernel(%arg0: i32, %arg1: i32, %arg2: memref<16x128xf32, #tpu.memory_space<vmem>>, %arg3: memref<1x128x256xf32, #tpu.memory_space<vmem>>, %arg4: memref<128x128xf32, #tpu.memory_space<vmem>>, %arg5: memref<16x128xf32, #tpu.memory_space<vmem>>, %arg6: memref<16x128xf32, #tpu.memory_space<vmem>>) attributes {dimension_semantics = [#tpu.dimension_semantics<parallel>, #tpu.dimension_semantics<arbitrary>], iteration_bounds = array<i64: 1, 1>, scalar_prefetch = 0 : i64, scratch_operands = 1 : i64, tpu.core_type = #tpu.core_type<tc>, window_params = [{transform_indices = @transform_0, window_bounds = array<i64: 16, 128>}, {transform_indices = @transform_1, window_bounds = array<i64: 1, 128, 256>}, {transform_indices = @transform_2, window_bounds = array<i64: 128, 128>}, {transform_indices = @transform_3, window_bounds = array<i64: 16, 128>}]} {
    %c0_i32 = arith.constant 0 : i32
    %0 = arith.cmpi eq, %arg1, %c0_i32 : i32
    %1 = arith.extui %0 : i1 to i32
    %c0_i32_0 = arith.constant 0 : i32
    %2 = arith.cmpi ne, %1, %c0_i32_0 : i32
    scf.if %2 {
      %cst_15 = arith.constant 0.000000e+00 : f32
      %24 = vector.broadcast %cst_15 : f32 to vector<16x128xf32>
      %c0_16 = arith.constant 0 : index
      %c0_17 = arith.constant 0 : index
      %25 = vector.load %arg6[%c0_16, %c0_17] : memref<16x128xf32, #tpu.memory_space<vmem>>, vector<16x128xf32>
      tpu.vector_store %arg6[%c0_16, %c0_17], %24 {strides = array<i32>} : memref<16x128xf32, #tpu.memory_space<vmem>>, vector<16x128xf32>,
    } else {
    }
    %c0 = arith.constant 0 : index
    %c0_1 = arith.constant 0 : index
    %3 = vector.load %arg2[%c0, %c0_1] : memref<16x128xf32, #tpu.memory_space<vmem>>, vector<16x128xf32>
    %c0_2 = arith.constant 0 : index
    %c0_3 = arith.constant 0 : index
    %c0_4 = arith.constant 0 : index
    %4 = vector.load %arg3[%c0_2, %c0_3, %c0_4] : memref<1x128x256xf32, #tpu.memory_space<vmem>>, vector<1x128x256xf32>
    %5 = vector.shape_cast %4 : vector<1x128x256xf32> to vector<128x256xf32>
    %cst = arith.constant dense<0.000000e+00> : vector<16x256xf32>
    %6 = tpu.matmul %3, %5, %cst {dimension_numbers = #tpu.dot_dimension_numbers<[1], [0], [0], [1], [0, 0, 1, 1], [], []>} : vector<16x128xf32>, vector<128x256xf32>, vector<16x256xf32> -> vector<16x256xf32>
    %7 = vector.extract_strided_slice %6 {offsets = [0, 0], sizes = [16, 128], strides = [1, 1]} : vector<16x256xf32> to vector<16x128xf32>
    %8 = vector.extract_strided_slice %6 {offsets = [0, 128], sizes = [16, 128], strides = [1, 1]} : vector<16x256xf32> to vector<16x128xf32>
    %9 = arith.negf %7 : vector<16x128xf32>
    %10 = math.exp %9 : vector<16x128xf32>
    %cst_5 = arith.constant 1.000000e+00 : f32
    %11 = vector.broadcast %cst_5 : f32 to vector<16x128xf32>
    %12 = arith.addf %11, %10 : vector<16x128xf32>
    %13 = arith.divf %11, %12 : vector<16x128xf32>
    %14 = arith.mulf %7, %13 : vector<16x128xf32>
    %15 = arith.mulf %14, %8 : vector<16x128xf32>
    %c0_6 = arith.constant 0 : index
    %c0_7 = arith.constant 0 : index
    %16 = vector.load %arg6[%c0_6, %c0_7] : memref<16x128xf32, #tpu.memory_space<vmem>>, vector<16x128xf32>
    %c0_8 = arith.constant 0 : index
    %c0_9 = arith.constant 0 : index
    %17 = vector.load %arg4[%c0_8, %c0_9] : memref<128x128xf32, #tpu.memory_space<vmem>>, vector<128x128xf32>
    %cst_10 = arith.constant dense<0.000000e+00> : vector<16x128xf32>
    %18 = tpu.matmul %15, %17, %cst_10 {dimension_numbers = #tpu.dot_dimension_numbers<[1], [0], [0], [1], [0, 0, 1, 1], [], []>} : vector<16x128xf32>, vector<128x128xf32>, vector<16x128xf32> -> vector<16x128xf32>
    %19 = arith.addf %16, %18 : vector<16x128xf32>
    %c0_11 = arith.constant 0 : index
    %c0_12 = arith.constant 0 : index
    %20 = vector.load %arg6[%c0_11, %c0_12] : memref<16x128xf32, #tpu.memory_space<vmem>>, vector<16x128xf32>
    tpu.vector_store %arg6[%c0_11, %c0_12], %19 {strides = array<i32>} : memref<16x128xf32, #tpu.memory_space<vmem>>, vector<16x128xf32>,
    %c0_i32_13 = arith.constant 0 : i32
    %21 = arith.cmpi eq, %arg1, %c0_i32_13 : i32
    %22 = arith.extui %21 : i1 to i32
    %c0_i32_14 = arith.constant 0 : i32
    %23 = arith.cmpi ne, %22, %c0_i32_14 : i32
    scf.if %23 {
      %c0_15 = arith.constant 0 : index
      %c0_16 = arith.constant 0 : index
      %24 = vector.load %arg6[%c0_15, %c0_16] : memref<16x128xf32, #tpu.memory_space<vmem>>, vector<16x128xf32>
      %c0_17 = arith.constant 0 : index
      %c0_18 = arith.constant 0 : index
      %25 = vector.load %arg5[%c0_17, %c0_18] : memref<16x128xf32, #tpu.memory_space<vmem>>, vector<16x128xf32>
      tpu.vector_store %arg5[%c0_17, %c0_18], %24 {strides = array<i32>} : memref<16x128xf32, #tpu.memory_space<vmem>>, vector<16x128xf32>,
    } else {
    }
    return
  }
  func.func @transform_0(%arg0: i32, %arg1: i32) -> (i32, i32) {
    %c0_i32 = arith.constant 0 : i32
    %c0_i32_0 = arith.constant 0 : i32
    return %arg0, %c0_i32 : i32, i32
  }
  func.func @transform_1(%arg0: i32, %arg1: i32) -> (i32, i32, i32) {
    %c0_i32 = arith.constant 0 : i32
    %c0_i32_0 = arith.constant 0 : i32
    %c0_i32_1 = arith.constant 0 : i32
    return %arg1, %c0_i32, %c0_i32_0 : i32, i32, i32
  }
  func.func @transform_2(%arg0: i32, %arg1: i32) -> (i32, i32) {
    %c0_i32 = arith.constant 0 : i32
    %c0_i32_0 = arith.constant 0 : i32
    return %arg1, %c0_i32 : i32, i32
  }
  func.func @transform_3(%arg0: i32, %arg1: i32) -> (i32, i32) {
    %c0_i32 = arith.constant 0 : i32
    %c0_i32_0 = arith.constant 0 : i32
    return %arg0, %c0_i32 : i32, i32
  }
}

</mosaic_0001>

<llo_original>
// kernel: tpu_custom_call.1
$region0: #{tpu_custom_call.1}
  #allocation0 [shape = 'u32[]', space=smem, size = 0x4, offset = 0x4, fixed_abs, tag = 'smem constant byte address 0x4 - core index']
  #allocation1 [shape = 'u32[144,128]{1,0:T(1,128)}', space=vmem, size = 0x12000, scoped, tag = 'internal scratch']
  #allocation2 [shape = 'f32[16,128]{1,0:T(8,128)}', space=vmem, size = 0x2000, scoped, tag = 'scratch operand']
  %s0 = inlined_call_operand.hbm [shape: f32[16,128], index: 0, kind: input, shape index: {}]
  %s1 = inlined_call_operand.hbm [shape: f32[1,128,256], index: 1, kind: input, shape index: {}]
  %s2 = inlined_call_operand.hbm [shape: f32[128,128], index: 2, kind: input, shape index: {}]
  %s3 = inlined_call_operand.hbm [shape: f32[16,128], index: 3, kind: output, shape index: {}]
  %s4 = sld [smem:[#allocation0]]
  $region42: #{tpu_custom_call.1} parent=0
    _
  %s6 = ssub.s32 1, %s4
  %s7 = scalar_select 0, %s6, %s4
  $region1: #{tpu_custom_call.1} parent=0
    #allocation3 [shape = 'u8[8192]{0}', space=vmem, size = 0x2000, scoped, tag = 'input window, operand 0, single buffered']
    #allocation4 [shape = 's32[1]{0}', space=sflag, size = 0x4, scoped, tag = 'scoped memory for tpu_custom_call.1']
    #allocation5 [shape = 's32[1]{0}', space=sflag, size = 0x4, scoped, tag = 'scoped memory for tpu_custom_call.1']
    #allocation6 [shape = 'u8[131072]{0}', space=vmem, size = 0x20000, scoped, tag = 'input window, operand 1, single buffered']
    #allocation7 [shape = 's32[1]{0}', space=sflag, size = 0x4, scoped, tag = 'scoped memory for tpu_custom_call.1']
    #allocation8 [shape = 'u8[65536]{0}', space=vmem, size = 0x10000, scoped, tag = 'input window, operand 2, single buffered']
    #allocation9 [shape = 'u8[8192]{0}', space=vmem, size = 0x2000, scoped, tag = 'output window, operand 0, single buffered']
    %8 = vsyncpa [#allocation4], 0
    %9 = vsyncpa [#allocation7], 0
    %10 = vsyncpa [#allocation5], 0
    // Predicated region
    $region2: #{tpu_custom_call.1} parent=1 // pred_check
      _
    $region3: #{tpu_custom_call.1} parent=1 // pred_check_branch
      %12 = sbr.rel (0) target = $region5
    $region4: #{tpu_custom_call.1} parent=1 // pred_region
      %s14 = ssub.s32 256, 256
      %15 = vsyncadd [#allocation4], %s14
      %s16 = sshll.u32 [#allocation3], 4
      %s17 = int_to_ptr.vmem [resolvable:$true] %s16
      %22 = dma.hbm_to_vmem [thread:$0]  %s0, 256, %s17, [#allocation4], 128, 128, 8
    $region5: #{tpu_custom_call.1} parent=1 // pred_fallthru
      _
    // Predicated region
    $region6: #{tpu_custom_call.1} parent=1 // pred_check
      _
    $region7: #{tpu_custom_call.1} parent=1 // pred_check_branch
      %24 = sbr.rel (0) target = $region9
    $region8: #{tpu_custom_call.1} parent=1 // pred_region
      %s26 = ssub.s32 4096, 4096
      %27 = vsyncadd [#allocation7], %s26
      %s28 = sshll.u32 [#allocation6], 4
      %s29 = int_to_ptr.vmem [resolvable:$true] %s28
      %34 = dma.hbm_to_vmem [thread:$0]  %s1, 4096, %s29, [#allocation7], 256, 256, 16
    $region9: #{tpu_custom_call.1} parent=1 // pred_fallthru
      _
    // Predicated region
    $region10: #{tpu_custom_call.1} parent=1 // pred_check
      _
    $region11: #{tpu_custom_call.1} parent=1 // pred_check_branch
      %36 = sbr.rel (0) target = $region13
    $region12: #{tpu_custom_call.1} parent=1 // pred_region
      %s38 = ssub.s32 2048, 2048
      %39 = vsyncadd [#allocation7], %s38
      %s40 = sshll.u32 [#allocation8], 4
      %s41 = int_to_ptr.vmem [resolvable:$true] %s40
      %46 = dma.hbm_to_vmem [thread:$0]  %s2, 2048, %s41, [#allocation7], 128, 128, 8
    $region13: #{tpu_custom_call.1} parent=1 // pred_fallthru
      _
    // Predicated region
    $region14: #{tpu_custom_call.1} parent=1 // pred_check
      _
    $region15: #{tpu_custom_call.1} parent=1 // pred_check_branch
      %48 = sbr.rel (0) target = $region17
    $region16: #{tpu_custom_call.1} parent=1 // pred_region
      %49 = dma.done [#allocation4], 256
    $region17: #{tpu_custom_call.1} parent=1 // pred_fallthru
      _
    // Predicated region
    $region18: #{tpu_custom_call.1} parent=1 // pred_check
      _
    $region19: #{tpu_custom_call.1} parent=1 // pred_check_branch
      %51 = sbr.rel (0) target = $region21
    $region20: #{tpu_custom_call.1} parent=1 // pred_region
      %52 = dma.done [#allocation7], 4096
    $region21: #{tpu_custom_call.1} parent=1 // pred_fallthru
      _
    // Predicated region
    $region22: #{tpu_custom_call.1} parent=1 // pred_check
      _
    $region23: #{tpu_custom_call.1} parent=1 // pred_check_branch
      %54 = sbr.rel (0) target = $region25
    $region24: #{tpu_custom_call.1} parent=1 // pred_region
      %55 = dma.done [#allocation7], 2048
    $region25: #{tpu_custom_call.1} parent=1 // pred_fallthru
      _
    %p56 = scmp.eq.s32.totalorder 0, 0
    // Predicated region
    $region26: #{tpu_custom_call.1} parent=1 // pred_check
      %p57 = pneg %p56
    $region27: #{tpu_custom_call.1} parent=1 // pred_check_branch
      %59 = sbr.rel (%p57) target = $region29
    $region28: #{tpu_custom_call.1} parent=1 // pred_region
      %60 = vst [vmem:[#allocation2] sm:$0xff] 0.0
      %61 = vst [vmem:[#allocation2 + $0x8] sm:$0xff] 0.0
    $region29: #{tpu_custom_call.1} parent=1 // pred_fallthru
      _
    %v62 = vld [vmem:[#allocation3] sm:$0xff]
    %v63 = vld [vmem:[#allocation3 + $0x8] sm:$0xff]
    %v64 = vld [vmem:[#allocation6] sm:$0xff]
    %v65 = vld [vmem:[#allocation6 + $0x8] sm:$0xff]
    %v66 = vld [vmem:[#allocation6 + $0x10] sm:$0xff]
    %v67 = vld [vmem:[#allocation6 + $0x18] sm:$0xff]
    %v68 = vld [vmem:[#allocation6 + $0x20] sm:$0xff]
    %v69 = vld [vmem:[#allocation6 + $0x28] sm:$0xff]
    %v70 = vld [vmem:[#allocation6 + $0x30] sm:$0xff]
    %v71 = vld [vmem:[#allocation6 + $0x38] sm:$0xff]
    %v72 = vld [vmem:[#allocation6 + $0x40] sm:$0xff]
    %v73 = vld [vmem:[#allocation6 + $0x48] sm:$0xff]
    %v74 = vld [vmem:[#allocation6 + $0x50] sm:$0xff]
    %v75 = vld [vmem:[#allocation6 + $0x58] sm:$0xff]
    %v76 = vld [vmem:[#allocation6 + $0x60] sm:$0xff]
    %v77 = vld [vmem:[#allocation6 + $0x68] sm:$0xff]
    %v78 = vld [vmem:[#allocation6 + $0x70] sm:$0xff]
    %v79 = vld [vmem:[#allocation6 + $0x78] sm:$0xff]
    %v80 = vld [vmem:[#allocation6 + $0x80] sm:$0xff]
    %v81 = vld [vmem:[#allocation6 + $0x88] sm:$0xff]
    %v82 = vld [vmem:[#allocation6 + $0x90] sm:$0xff]
    %v83 = vld [vmem:[#allocation6 + $0x98] sm:$0xff]
    %v84 = vld [vmem:[#allocation6 + $0xa0] sm:$0xff]
    %v85 = vld [vmem:[#allocation6 + $0xa8] sm:$0xff]
    %v86 = vld [vmem:[#allocation6 + $0xb0] sm:$0xff]
    %v87 = vld [vmem:[#allocation6 + $0xb8] sm:$0xff]
    %v88 = vld [vmem:[#allocation6 + $0xc0] sm:$0xff]
    %v89 = vld [vmem:[#allocation6 + $0xc8] sm:$0xff]
    %v90 = vld [vmem:[#allocation6 + $0xd0] sm:$0xff]
    %v91 = vld [vmem:[#allocation6 + $0xd8] sm:$0xff]
    %v92 = vld [vmem:[#allocation6 + $0xe0] sm:$0xff]
    %v93 = vld [vmem:[#allocation6 + $0xe8] sm:$0xff]
    %v94 = vld [vmem:[#allocation6 + $0xf0] sm:$0xff]
    %v95 = vld [vmem:[#allocation6 + $0xf8] sm:$0xff]
    %96 = vmatprep.subr.mxu0 %v65
    %97 = vmatpush1.msra.mxu0 %v64
    %98 = vmatprep.subr.mxu0 %v67
    %99 = vmatpush1.msra.mxu0 %v66
    %100 = vmatprep.subr.mxu0 %v69
    %101 = vmatpush1.msra.mxu0 %v68
    %102 = vmatprep.subr.mxu0 %v71
    %103 = vmatpush1.msra.mxu0 %v70
    %104 = vmatprep.subr.mxu0 %v73
    %105 = vmatpush1.msra.mxu0 %v72
    %106 = vmatprep.subr.mxu0 %v75
    %107 = vmatpush1.msra.mxu0 %v74
    %108 = vmatprep.subr.mxu0 %v77
    %109 = vmatpush1.msra.mxu0 %v76
    %110 = vmatprep.subr.mxu0 %v79
    %111 = vmatpush1.msra.mxu0 %v78
    %112 = vmatprep.subr.mxu0 %v81
    %113 = vmatpush1.msra.mxu0 %v80
    %114 = vmatprep.subr.mxu0 %v83
    %115 = vmatpush1.msra.mxu0 %v82
    %116 = vmatprep.subr.mxu0 %v85
    %117 = vmatpush1.msra.mxu0 %v84
    %118 = vmatprep.subr.mxu0 %v87
    %119 = vmatpush1.msra.mxu0 %v86
    %120 = vmatprep.subr.mxu0 %v89
    %121 = vmatpush1.msra.mxu0 %v88
    %122 = vmatprep.subr.mxu0 %v91
    %123 = vmatpush1.msra.mxu0 %v90
    %124 = vmatprep.subr.mxu0 %v93
    %125 = vmatpush1.msra.mxu0 %v92
    %126 = vmatprep.subr.mxu0 %v95
    %127 = vmatpush1.msra.mxu0 %v94
    %128 = vmatprep.subr.mxu0 0.0
    %129 = vmatpush1.msra.mxu0 0.0
    %130 = vmatprep.subr.mxu0 0.0
    %131 = vmatpush1.msra.mxu0 0.0
    %132 = vmatprep.subr.mxu0 0.0
    %133 = vmatpush1.msra.mxu0 0.0
    %134 = vmatprep.subr.mxu0 0.0
    %135 = vmatpush1.msra.mxu0 0.0
    %136 = vmatprep.subr.mxu0 0.0
    %137 = vmatpush1.msra.mxu0 0.0
    %138 = vmatprep.subr.mxu0 0.0
    %139 = vmatpush1.msra.mxu0 0.0
    %140 = vmatprep.subr.mxu0 0.0
    %141 = vmatpush1.msra.mxu0 0.0
    %142 = vmatprep.subr.mxu0 0.0
    %143 = vmatpush1.msra.mxu0 0.0
    %144 = vmatprep.subr.mxu0 0.0
    %145 = vmatpush1.msra.mxu0 0.0
    %146 = vmatprep.subr.mxu0 0.0
    %147 = vmatpush1.msra.mxu0 0.0
    %148 = vmatprep.subr.mxu0 0.0
    %149 = vmatpush1.msra.mxu0 0.0
    %150 = vmatprep.subr.mxu0 0.0
    %151 = vmatpush1.msra.mxu0 0.0
    %152 = vmatprep.subr.mxu0 0.0
    %153 = vmatpush1.msra.mxu0 0.0
    %154 = vmatprep.subr.mxu0 0.0
    %155 = vmatpush1.msra.mxu0 0.0
    %156 = vmatprep.subr.mxu0 0.0
    %157 = vmatpush1.msra.mxu0 0.0
    %158 = vmatprep.subr.mxu0 0.0
    %159 = vmatpush1.msra.mxu0 0.0
    %160 = vmatprep.mubr.f32.mxu0 0.0
    %161 = vmatmul.mubr.f32.gmra.mrb[0].mxu0 %v62
    %v162 = vpop.f32.mrb[0].mxu0
    %v163 = vadd.f32 0.0, %v162
    %v164 = vpop.f32.mrb[0].mxu0
    %v165 = vadd.f32 0.0, %v164
    %166 = vmatprep.mubr.f32.mxu0 0.0
    %167 = vmatmul.mubr.f32.gmra.mrb[0].mxu0 %v63
    %v168 = vpop.f32.mrb[0].mxu0
    %v169 = vadd.f32 0.0, %v168
    %v170 = vpop.f32.mrb[0].mxu0
    %v171 = vadd.f32 0.0, %v170
    %172 = vdwg.mxu0
    %v173 = vxor.u32 %v163, 2147483648
    %v174 = vxor.u32 %v169, 2147483648
    %v175 = vmul.f32 %v173, 1.442695
    %v176 = vpow.pop %v175
    %v177 = vmul.f32 %v174, 1.442695
    %v178 = vpow.pop %v177
    %v179 = vadd.f32 %v176, 1.0
    %v180 = vadd.f32 %v178, 1.0
    %v181 = vrcp.pop %v179
    %v182 = vmul.f32 1.0, %v181
    %v183 = vrcp.pop %v180
    %v184 = vmul.f32 1.0, %v183
    %v185 = vmul.f32 %v163, %v182
    %v186 = vmul.f32 %v169, %v184
    %v187 = vmul.f32 %v185, %v165
    %v188 = vmul.f32 %v186, %v171
    %v189 = vld [vmem:[#allocation2] sm:$0xff]
    %v190 = vld [vmem:[#allocation2 + $0x8] sm:$0xff]
    %v191 = vld [vmem:[#allocation8] sm:$0xff]
    %v192 = vld [vmem:[#allocation8 + $0x8] sm:$0xff]
    %v193 = vld [vmem:[#allocation8 + $0x10] sm:$0xff]
    %v194 = vld [vmem:[#allocation8 + $0x18] sm:$0xff]
    %v195 = vld [vmem:[#allocation8 + $0x20] sm:$0xff]
    %v196 = vld [vmem:[#allocation8 + $0x28] sm:$0xff]
    %v197 = vld [vmem:[#allocation8 + $0x30] sm:$0xff]
    %v198 = vld [vmem:[#allocation8 + $0x38] sm:$0xff]
    %v199 = vld [vmem:[#allocation8 + $0x40] sm:$0xff]
    %v200 = vld [vmem:[#allocation8 + $0x48] sm:$0xff]
    %v201 = vld [vmem:[#allocation8 + $0x50] sm:$0xff]
    %v202 = vld [vmem:[#allocation8 + $0x58] sm:$0xff]
    %v203 = vld [vmem:[#allocation8 + $0x60] sm:$0xff]
    %v204 = vld [vmem:[#allocation8 + $0x68] sm:$0xff]
    %v205 = vld [vmem:[#allocation8 + $0x70] sm:$0xff]
    %v206 = vld [vmem:[#allocation8 + $0x78] sm:$0xff]
    %207 = vmatprep.subr.mxu0 0.0
    %208 = vmatpush1.msra.mxu0 %v191
    %209 = vmatprep.subr.mxu0 0.0
    %210 = vmatpush1.msra.mxu0 %v192
    %211 = vmatprep.subr.mxu0 0.0
    %212 = vmatpush1.msra.mxu0 %v193
    %213 = vmatprep.subr.mxu0 0.0
    %214 = vmatpush1.msra.mxu0 %v194
    %215 = vmatprep.subr.mxu0 0.0
    %216 = vmatpush1.msra.mxu0 %v195
    %217 = vmatprep.subr.mxu0 0.0
    %218 = vmatpush1.msra.mxu0 %v196
    %219 = vmatprep.subr.mxu0 0.0
    %220 = vmatpush1.msra.mxu0 %v197
    %221 = vmatprep.subr.mxu0 0.0
    %222 = vmatpush1.msra.mxu0 %v198
    %223 = vmatprep.subr.mxu0 0.0
    %224 = vmatpush1.msra.mxu0 %v199
    %225 = vmatprep.subr.mxu0 0.0
    %226 = vmatpush1.msra.mxu0 %v200
    %227 = vmatprep.subr.mxu0 0.0
    %228 = vmatpush1.msra.mxu0 %v201
    %229 = vmatprep.subr.mxu0 0.0
    %230 = vmatpush1.msra.mxu0 %v202
    %231 = vmatprep.subr.mxu0 0.0
    %232 = vmatpush1.msra.mxu0 %v203
    %233 = vmatprep.subr.mxu0 0.0
    %234 = vmatpush1.msra.mxu0 %v204
    %235 = vmatprep.subr.mxu0 0.0
    %236 = vmatpush1.msra.mxu0 %v205
    %237 = vmatprep.subr.mxu0 0.0
    %238 = vmatpush1.msra.mxu0 %v206
    %239 = vmatprep.subr.mxu0 0.0
    %240 = vmatpush1.msra.mxu0 0.0
    %241 = vmatprep.subr.mxu0 0.0
    %242 = vmatpush1.msra.mxu0 0.0
    %243 = vmatprep.subr.mxu0 0.0
    %244 = vmatpush1.msra.mxu0 0.0
    %245 = vmatprep.subr.mxu0 0.0
    %246 = vmatpush1.msra.mxu0 0.0
    %247 = vmatprep.subr.mxu0 0.0
    %248 = vmatpush1.msra.mxu0 0.0
    %249 = vmatprep.subr.mxu0 0.0
    %250 = vmatpush1.msra.mxu0 0.0
    %251 = vmatprep.subr.mxu0 0.0
    %252 = vmatpush1.msra.mxu0 0.0
    %253 = vmatprep.subr.mxu0 0.0
    %254 = vmatpush1.msra.mxu0 0.0
    %255 = vmatprep.subr.mxu0 0.0
    %256 = vmatpush1.msra.mxu0 0.0
    %257 = vmatprep.subr.mxu0 0.0
    %258 = vmatpush1.msra.mxu0 0.0
    %259 = vmatprep.subr.mxu0 0.0
    %260 = vmatpush1.msra.mxu0 0.0
    %261 = vmatprep.subr.mxu0 0.0
    %262 = vmatpush1.msra.mxu0 0.0
    %263 = vmatprep.subr.mxu0 0.0
    %264 = vmatpush1.msra.mxu0 0.0
    %265 = vmatprep.subr.mxu0 0.0
    %266 = vmatpush1.msra.mxu0 0.0
    %267 = vmatprep.subr.mxu0 0.0
    %268 = vmatpush1.msra.mxu0 0.0
    %269 = vmatprep.subr.mxu0 0.0
    %270 = vmatpush1.msra.mxu0 0.0
    %271 = vmatprep.mubr.f32.mxu0 0.0
    %272 = vmatmul.mubr.f32.gmra.mrb[0].mxu0 %v187
    %v273 = vpop.f32.mrb[0].mxu0
    %v274 = vadd.f32 0.0, %v273
    %v275 = vpop.f32.mrb[0].mxu0
    %276 = vmatprep.mubr.f32.mxu0 0.0
    %277 = vmatmul.mubr.f32.gmra.mrb[0].mxu0 %v188
    %v278 = vpop.f32.mrb[0].mxu0
    %v279 = vadd.f32 0.0, %v278
    %v280 = vpop.f32.mrb[0].mxu0
    %281 = vdwg.mxu0
    %v282 = vadd.f32 %v189, %v274
    %v283 = vadd.f32 %v190, %v279
    %284 = vst [vmem:[#allocation2] sm:$0xff] %v282
    %285 = vst [vmem:[#allocation2 + $0x8] sm:$0xff] %v283
    // Predicated region
    $region30: #{tpu_custom_call.1} parent=1 // pred_check
      %p286 = pneg %p56
    $region31: #{tpu_custom_call.1} parent=1 // pred_check_branch
      %288 = sbr.rel (%p286) target = $region33
    $region32: #{tpu_custom_call.1} parent=1 // pred_region
      %v289 = vld [vmem:[#allocation2] sm:$0xff]
      %v290 = vld [vmem:[#allocation2 + $0x8] sm:$0xff]
      %291 = vst [vmem:[#allocation9] sm:$0xff] %v289
      %292 = vst [vmem:[#allocation9 + $0x8] sm:$0xff] %v290
    $region33: #{tpu_custom_call.1} parent=1 // pred_fallthru
      _
    // Predicated region
    $region34: #{tpu_custom_call.1} parent=1 // pred_check
      _
    $region35: #{tpu_custom_call.1} parent=1 // pred_check_branch
      %294 = sbr.rel (0) target = $region37
    $region36: #{tpu_custom_call.1} parent=1 // pred_region
      %s296 = ssub.s32 256, 256
      %297 = vsyncadd [#allocation5], %s296
      %s298 = sshll.u32 [#allocation9], 4
      %s299 = int_to_ptr.vmem [resolvable:$true] %s298
      %304 = dma.vmem_to_hbm [thread:$0]  %s299, 256, %s3, [#allocation5], 128, 128, 8
    $region37: #{tpu_custom_call.1} parent=1 // pred_fallthru
      _
    // Predicated region
    $region38: #{tpu_custom_call.1} parent=1 // pred_check
      _
    $region39: #{tpu_custom_call.1} parent=1 // pred_check_branch
      %306 = sbr.rel (0) target = $region41
    $region40: #{tpu_custom_call.1} parent=1 // pred_region
      %307 = dma.done [#allocation5], 256
    $region41: #{tpu_custom_call.1} parent=1 // pred_fallthru
      _
    %308 = vsyncpa [#allocation4], 1
    %309 = vsyncpa [#allocation7], 1
    %310 = vsyncpa [#allocation5], 1

</llo_original>
